<compile_context>
chip_gen: v7x
topology: tpu7x:2x2x1
jax: 0.10.0
libtpu: 0.0.40
codegen_flags: <defaults>
</compile_context>

<pallas_src>
import functools

import jax
import jax.numpy as jnp
from jax import lax
from jax.experimental import pallas as pl
from jax.experimental.pallas import tpu as pltpu

SUNRGBD_FRQ = [
    0.3829, 0.452448, 0.637584, 0.377464, 0.585595, 0.479574, 0.781544,
    0.982534, 1.017466, 0.624581, 2.589096, 0.980794, 0.92034, 0.667984,
    1.172291, 0.86224, 0.921714, 2.154782, 1.187832, 1.178115, 1.848545,
    1.428922, 2.849658, 0.771605, 1.656668, 4.483506, 2.209922, 1.12028,
    2.790182, 0.706519, 3.994768, 2.220004, 0.972934, 1.481525, 5.342475,
    0.750738, 4.040773,
]


def _focal_kernel(x_ref, t_ref, l_ref, alpha_ref, acc_ref, *,
                  gamma, thresh, hw, tp, tiles_per_split, need_mask):
    """One pixel tile of one (sample, split): weighted CE -> focal -> packed partial sums."""
    p = pl.program_id(2)

    @pl.when(p == 0)
    def _():
        acc_ref[...] = jnp.zeros_like(acc_ref)

    # bf16 (or f32) class scores; upcast after the load so HBM traffic stays
    # at the storage dtype while all math runs in f32.
    x = x_ref[...].astype(jnp.float32)           # (C, TP)
    t_raw = t_ref[...]                           # (1, TP) int32 targets (0 = ignore)
    l = l_ref[...].astype(jnp.float32)           # (1, TP) confidence (in-kernel cast)
    a_row = alpha_ref[...]                       # (1, C)  per-class weights

    tgt_pos = t_raw > 0                          # valid-target mask
    t_m = t_raw - tgt_pos.astype(jnp.int32)      # targets_m: valid labels shifted by -1
    # NOTE: labels > C match no one-hot row and contribute 0 to the focal sum
    # while still counting in mask_sum (PyTorch's gather would error instead).

    if need_mask:
        # Remainder / clamped-tile handling: mask lanes whose global pixel
        # index is past the end of the image.
        g = pl.program_id(1) * tiles_per_split + p          # global tile index
        lane = lax.broadcasted_iota(jnp.int32, t_raw.shape, 1)
        in_bounds = (g * tp + lane) < hw
        valid = jnp.logical_and(tgt_pos, in_bounds)
    else:
        in_bounds = None
        valid = tgt_pos

    # one-hot of the target class along the sublane (class) axis
    class_ids = lax.broadcasted_iota(jnp.int32, x.shape, 0)  # (C, TP)
    onehot = class_ids == t_m                                # (C, TP) bool

    # log-softmax denominator (sublane reductions on the XLU, exp on the EUP)
    mx = jnp.max(x, axis=0, keepdims=True)                   # (1, TP)
    lse = jnp.log(jnp.sum(jnp.exp(x - mx), axis=0, keepdims=True)) + mx

    # x[t]: select + sublane reduce (XLU).  select, not multiply, so garbage
    # lanes of a partial tile cannot produce NaN*0.
    x_t = jnp.sum(jnp.where(onehot, x, 0.0), axis=0, keepdims=True)      # (1, TP)
    # alpha[t]: (1, C) @ (C, TP) on the otherwise-idle MXU.
    alpha_t = jnp.dot(a_row, onehot.astype(jnp.float32),
                      preferred_element_type=jnp.float32)                # (1, TP)

    ce = alpha_t * (lse - x_t)                                           # (1, TP)
    pt = jnp.exp(-ce)
    q = 1.0 - pt
    if gamma == 2:                         # keep the pow on the VPU (no exp/log)
        modulator = q * q
    elif float(gamma) == int(gamma):
        modulator = lax.integer_pow(q, int(gamma))
    else:
        modulator = q ** gamma
    focal = modulator * ce

    thr = l >= thresh
    if in_bounds is not None:
        thr = jnp.logical_and(thr, in_bounds)

    # Packed (3, TP) running sums: [masked focal; valid count; thresh count].
    contrib = jnp.concatenate(
        [jnp.where(valid, focal, 0.0),
         valid.astype(jnp.float32),
         thr.astype(jnp.float32)],
        axis=0)
    acc_ref[...] += contrib


def focal_loss2d_u_alia(inputs_scales, targets_scales, logits, *,
                        alpha, gamma=2, thresh=0.95,
                        tile_pixels=16384, pixel_splits=None,
                        vmem_limit_bytes=48 * 1024 * 1024):
    """Pallas equivalent of FocalLoss2d_u_ALIA.forward.

    inputs_scales:  (N, C, H, W) class scores (f32 or bf16; bf16 halves HBM traffic)
    targets_scales: (N, H, W) int labels, 0 = ignore, 1..C valid
    logits:         (N, H, W) confidence map
    Returns (loss_mean, thresh_mask_mean) scalars.

    Tuning (sweep tile_pixels first, then vmem_limit_bytes):
      v6e : tile_pixels=32768, vmem_limit_bytes≈64-96 MiB
      v7x : tile_pixels=16384, vmem_limit_bytes≈40-48 MiB (64 MiB physical VMEM)
      v5e : tile_pixels=4096-8192 (or raise the limit; 16 MiB default scope)
    pixel_splits: dual-TC pixel split (v7x).  Default: 2 when N is odd, else 1.
    """
    N, C, H, W = inputs_scales.shape
    HW = H * W

    # Pixel tile: multiple of 128, as large as comfortably fits VMEM, never
    # larger than the pixel count (tp == HW is always a legal block width).
    tp = min(int(tile_pixels), HW)
    if tp < HW:
        tp = max(128, (tp // 128) * 128)
        if tp >= HW:
            tp = HW
    num_p = pl.cdiv(HW, tp)

    # Dual-TC occupancy (v7x): split the pixel-tile range across a second
    # "parallel" axis when the batch alone can't feed both cores.
    if pixel_splits is None:
        pixel_splits = 2 if (N % 2 == 1) else 1
    n_splits = max(1, min(int(pixel_splits), num_p))
    tiles_per_split = pl.cdiv(num_p, n_splits)
    overflow = n_splits * tiles_per_split != num_p
    need_mask = (HW % tp != 0) or overflow

    # Free reshapes only -- no transpose, no pad of the big activation slab.
    x = inputs_scales.reshape(N, C, HW)
    t = targets_scales.reshape(N, 1, HW)
    if t.dtype != jnp.int32:
        t = t.astype(jnp.int32)          # no-op for int32 callers
    lg = logits.reshape(N, 1, HW)        # dtype cast happens in-kernel
    a = jnp.asarray(alpha, jnp.float32).reshape(1, C)

    def tile_index(s, p):
        g = s * tiles_per_split + p
        if overflow:
            # Keep the DMA in-bounds for the (rare) past-the-end tile of the
            # last split; its lanes are fully masked in-kernel.
            g = jnp.minimum(g, num_p - 1)
        return g

    kernel = functools.partial(
        _focal_kernel, gamma=gamma, thresh=thresh, hw=HW, tp=tp,
        tiles_per_split=tiles_per_split, need_mask=need_mask)

    acc = pl.pallas_call(
        kernel,
        out_shape=jax.ShapeDtypeStruct((N, n_splits, 3, tp), jnp.float32),
        grid_spec=pltpu.PrefetchScalarGridSpec(
            num_scalar_prefetch=0,
            grid=(N, n_splits, tiles_per_split),
            in_specs=[
                pl.BlockSpec((pl.Squeezed(), C, tp),
                             lambda n, s, p: (n, 0, tile_index(s, p))),   # x
                pl.BlockSpec((pl.Squeezed(), 1, tp),
                             lambda n, s, p: (n, 0, tile_index(s, p))),   # targets
                pl.BlockSpec((pl.Squeezed(), 1, tp),
                             lambda n, s, p: (n, 0, tile_index(s, p))),   # logits
                pl.BlockSpec((1, C), lambda n, s, p: (0, 0)),             # alpha row
            ],
            out_specs=pl.BlockSpec((pl.Squeezed(), pl.Squeezed(), 3, tp),
                                   lambda n, s, p: (n, s, 0, 0)),         # packed acc
        ),
        compiler_params=pltpu.CompilerParams(
            # batch & split axes parallel (v7x dual-TC), pixel axis reduction.
            dimension_semantics=("parallel", "parallel", "arbitrary"),
            vmem_limit_bytes=int(vmem_limit_bytes)),
    )(x, t, lg, a)

    sums = jnp.sum(acc, axis=(0, 1, 3))            # (3,) = [focal, mask, thresh]
    scalar = sums[0] / sums[1]                     # sum(focal[mask]) / sum(mask)
    thresh_mean = sums[2] / jnp.float32(N * HW)    # thresh_mask.float().mean()
    # (scalar * thresh_mask).mean() == scalar * thresh_mask.mean()
    return scalar * thresh_mean, thresh_mean


def _reference(inputs, targets, logits, alpha, gamma=2, thresh=0.95):
    """Pure-JAX reference reproducing the PyTorch forward."""
    inputs = inputs.astype(jnp.float32)
    mask = targets > 0
    t_m = (targets - mask.astype(targets.dtype)).astype(jnp.int32)
    logp = jax.nn.log_softmax(inputs, axis=1)
    lp_t = jnp.take_along_axis(logp, t_m[:, None, :, :], axis=1)[:, 0]
    ce = -alpha[t_m] * lp_t
    pt = jnp.exp(-ce)
    focal = (1.0 - pt) ** gamma * ce
    scalar = jnp.sum(jnp.where(mask, focal, 0.0)) / jnp.sum(mask.astype(jnp.float32))
    tm = (logits.astype(jnp.float32) >= thresh).astype(jnp.float32)
    return scalar * jnp.mean(tm), jnp.mean(tm)


if __name__ == "__main__":
    key = jax.random.PRNGKey(0)
    k1, k2, k3 = jax.random.split(key, 3)

    alpha = jnp.asarray(SUNRGBD_FRQ, jnp.float32)
    N, C, H, W = 2, len(SUNRGBD_FRQ), 16, 16   # C = 37 (SUNRGBD class-frequency weights)
    inputs_scales = jax.random.normal(k1, (N, C, H, W), jnp.float32)
    targets_scales = jax.random.randint(k2, (N, H, W), 0, C + 1).astype(jnp.int32)
    logits = jax.random.uniform(k3, (N, H, W), dtype=jnp.float32)

    # 1) f32 path, whole image in one tile.
    loss, thresh_mean = focal_loss2d_u_alia(
        inputs_scales, targets_scales, logits, alpha=SUNRGBD_FRQ)
    jax.block_until_ready((loss, thresh_mean))
    ref_loss, ref_tm = _reference(inputs_scales, targets_scales, logits, alpha)
    assert jnp.allclose(loss, ref_loss, rtol=1e-4, atol=1e-5), (loss, ref_loss)
    assert jnp.allclose(thresh_mean, ref_tm, rtol=1e-6, atol=1e-6), (thresh_mean, ref_tm)

    # 2) bf16 activation storage: in-kernel upcast, f32 math.
    x_bf16 = inputs_scales.astype(jnp.bfloat16)
    loss_b, tm_b = focal_loss2d_u_alia(x_bf16, targets_scales, logits, alpha=SUNRGBD_FRQ)
    jax.block_until_ready((loss_b, tm_b))
    ref_loss_b, ref_tm_b = _reference(x_bf16, targets_scales, logits, alpha)
    assert jnp.allclose(loss_b, ref_loss_b, rtol=1e-4, atol=1e-5), (loss_b, ref_loss_b)
    assert jnp.allclose(tm_b, ref_tm_b, rtol=1e-6, atol=1e-6), (tm_b, ref_tm_b)

    # 3) Remainder path: HW = 400 with 128-wide tiles -> last pixel tile is
    #    partial and must be masked in-kernel (exercises the iota lane mask).
    H2 = W2 = 20
    i2 = jax.random.normal(k1, (N, C, H2, W2), jnp.float32)
    t2 = jax.random.randint(k2, (N, H2, W2), 0, C + 1).astype(jnp.int32)
    l2 = jax.random.uniform(k3, (N, H2, W2), dtype=jnp.float32)
    loss2, tm2 = focal_loss2d_u_alia(i2, t2, l2, alpha=SUNRGBD_FRQ, tile_pixels=128)
    jax.block_until_ready((loss2, tm2))
    ref_loss2, ref_tm2 = _reference(i2, t2, l2, alpha)
    assert jnp.allclose(loss2, ref_loss2, rtol=1e-4, atol=1e-5), (loss2, ref_loss2)
    assert jnp.allclose(tm2, ref_tm2, rtol=1e-6, atol=1e-6), (tm2, ref_tm2)

    # 4) N = 1 (odd) -> dual-TC pixel split (pixel_splits auto = 2) with an odd
    #    tile count (5 tiles over 2 splits), exercising the clamped empty tile.
    H3 = W3 = 24
    i3 = jax.random.normal(k1, (1, C, H3, W3), jnp.float32)
    t3 = jax.random.randint(k2, (1, H3, W3), 0, C + 1).astype(jnp.int32)
    l3 = jax.random.uniform(k3, (1, H3, W3), dtype=jnp.float32)
    loss3, tm3 = focal_loss2d_u_alia(i3, t3, l3, alpha=SUNRGBD_FRQ, tile_pixels=128)
    jax.block_until_ready((loss3, tm3))
    ref_loss3, ref_tm3 = _reference(i3, t3, l3, alpha)
    assert jnp.allclose(loss3, ref_loss3, rtol=1e-4, atol=1e-5), (loss3, ref_loss3)
    assert jnp.allclose(tm3, ref_tm3, rtol=1e-6, atol=1e-6), (tm3, ref_tm3)

    print("KERNEL_OK")
</pallas_src>

<mosaic_0001>
module attributes {stable_mosaic.version = 11 : i64} {
  func.func @_focal_kernel(%arg0: i32, %arg1: i32, %arg2: i32, %arg3: memref<1x37x256xf32, #tpu.memory_space<vmem>>, %arg4: memref<1x1x256xi32, #tpu.memory_space<vmem>>, %arg5: memref<1x1x256xf32, #tpu.memory_space<vmem>>, %arg6: memref<1x37xf32, #tpu.memory_space<vmem>>, %arg7: memref<1x1x3x256xf32, #tpu.memory_space<vmem>>) attributes {dimension_semantics = [#tpu.dimension_semantics<parallel>, #tpu.dimension_semantics<parallel>, #tpu.dimension_semantics<arbitrary>], iteration_bounds = array<i64: 2, 1, 1>, scalar_prefetch = 0 : i64, scratch_operands = 0 : i64, tpu.core_type = #tpu.core_type<tc>, window_params = [{transform_indices = @transform_0, window_bounds = array<i64: 1, 37, 256>}, {transform_indices = @transform_1, window_bounds = array<i64: 1, 1, 256>}, {transform_indices = @transform_2, window_bounds = array<i64: 1, 1, 256>}, {pipeline_mode = #tpu.pipeline_mode<synchronous>, transform_indices = @transform_3, window_bounds = array<i64: 1, 37>}, {transform_indices = @transform_4, window_bounds = array<i64: 1, 1, 3, 256>}]} {
    %c0_i32 = arith.constant 0 : i32
    %0 = arith.cmpi eq, %arg2, %c0_i32 : i32
    %1 = arith.extui %0 : i1 to i32
    %c0_i32_0 = arith.constant 0 : i32
    %2 = arith.cmpi ne, %1, %c0_i32_0 : i32
    scf.if %2 {
      %cst_28 = arith.constant 0.000000e+00 : f32
      %57 = vector.broadcast %cst_28 : f32 to vector<3x256xf32>
      %c0_29 = arith.constant 0 : index
      %c0_30 = arith.constant 0 : index
      %c0_31 = arith.constant 0 : index
      %c0_32 = arith.constant 0 : index
      %58 = vector.load %arg7[%c0_29, %c0_30, %c0_31, %c0_32] : memref<1x1x3x256xf32, #tpu.memory_space<vmem>>, vector<1x1x3x256xf32>
      %59 = vector.shape_cast %58 : vector<1x1x3x256xf32> to vector<3x256xf32>
      %60 = vector.shape_cast %57 : vector<3x256xf32> to vector<1x1x3x256xf32>
      tpu.vector_store %arg7[%c0_29, %c0_30, %c0_31, %c0_32], %60 {strides = array<i32>} : memref<1x1x3x256xf32, #tpu.memory_space<vmem>>, vector<1x1x3x256xf32>,
    } else {
    }
    %c0 = arith.constant 0 : index
    %c0_1 = arith.constant 0 : index
    %c0_2 = arith.constant 0 : index
    %3 = vector.load %arg3[%c0, %c0_1, %c0_2] : memref<1x37x256xf32, #tpu.memory_space<vmem>>, vector<1x37x256xf32>
    %4 = vector.shape_cast %3 : vector<1x37x256xf32> to vector<37x256xf32>
    %c0_3 = arith.constant 0 : index
    %c0_4 = arith.constant 0 : index
    %c0_5 = arith.constant 0 : index
    %5 = vector.load %arg4[%c0_3, %c0_4, %c0_5] : memref<1x1x256xi32, #tpu.memory_space<vmem>>, vector<1x1x256xi32>
    %6 = vector.shape_cast %5 : vector<1x1x256xi32> to vector<1x256xi32>
    %c0_6 = arith.constant 0 : index
    %c0_7 = arith.constant 0 : index
    %c0_8 = arith.constant 0 : index
    %7 = vector.load %arg5[%c0_6, %c0_7, %c0_8] : memref<1x1x256xf32, #tpu.memory_space<vmem>>, vector<1x1x256xf32>
    %8 = vector.shape_cast %7 : vector<1x1x256xf32> to vector<1x256xf32>
    %c0_9 = arith.constant 0 : index
    %c0_10 = arith.constant 0 : index
    %9 = vector.load %arg6[%c0_9, %c0_10] : memref<1x37xf32, #tpu.memory_space<vmem>>, vector<1x37xf32>
    %c0_i32_11 = arith.constant 0 : i32
    %10 = vector.broadcast %c0_i32_11 : i32 to vector<1x256xi32>
    %11 = arith.cmpi sgt, %6, %10 : vector<1x256xi32>
    %12 = arith.extui %11 : vector<1x256xi1> to vector<1x256xi32>
    %13 = arith.subi %6, %12 : vector<1x256xi32>
    %14 = tpu.iota {dimensions = array<i32: 0>} : vector<37x256xi32>
    %15 = vector.broadcast %13 : vector<1x256xi32> to vector<37x256xi32>
    %16 = arith.cmpi eq, %14, %15 : vector<37x256xi32>
    %cst = arith.constant dense<0xFF800000> : vector<256xf32>
    %17 = vector.multi_reduction <maximumf>, %4, %cst [0] : vector<37x256xf32> to vector<256xf32>
    %18 = vector.shape_cast %17 : vector<256xf32> to vector<1x256xf32>
    %19 = vector.broadcast %18 : vector<1x256xf32> to vector<37x256xf32>
    %20 = arith.subf %4, %19 : vector<37x256xf32>
    %21 = math.exp %20 : vector<37x256xf32>
    %cst_12 = arith.constant dense<0.000000e+00> : vector<256xf32>
    %22 = vector.multi_reduction <add>, %21, %cst_12 [0] : vector<37x256xf32> to vector<256xf32>
    %23 = vector.shape_cast %22 : vector<256xf32> to vector<1x256xf32>
    %24 = math.log %23 : vector<1x256xf32>
    %25 = arith.addf %24, %18 : vector<1x256xf32>
    %cst_13 = arith.constant 0.000000e+00 : f32
    %26 = vector.broadcast %cst_13 : f32 to vector<37x256xf32>
    %27 = arith.select %16, %4, %26 : vector<37x256xi1>, vector<37x256xf32>
    %cst_14 = arith.constant dense<0.000000e+00> : vector<256xf32>
    %28 = vector.multi_reduction <add>, %27, %cst_14 [0] : vector<37x256xf32> to vector<256xf32>
    %29 = vector.shape_cast %28 : vector<256xf32> to vector<1x256xf32>
    %30 = arith.extui %16 : vector<37x256xi1> to vector<37x256xi32>
    %31 = arith.sitofp %30 : vector<37x256xi32> to vector<37x256xf32>
    %cst_15 = arith.constant dense<0.000000e+00> : vector<1x256xf32>
    %32 = tpu.matmul %9, %31, %cst_15 {dimension_numbers = #tpu.dot_dimension_numbers<[1], [0], [0], [1], [0, 0, 1, 1], [], []>} : vector<1x37xf32>, vector<37x256xf32>, vector<1x256xf32> -> vector<1x256xf32>
    %33 = arith.subf %25, %29 : vector<1x256xf32>
    %34 = arith.mulf %32, %33 : vector<1x256xf32>
    %cst_16 = arith.constant 0.000000e+00 : f32
    %35 = vector.broadcast %cst_16 : f32 to vector<1x256xf32>
    %36 = arith.subf %35, %34 : vector<1x256xf32>
    %37 = math.exp %36 : vector<1x256xf32>
    %cst_17 = arith.constant 1.000000e+00 : f32
    %38 = vector.broadcast %cst_17 : f32 to vector<1x256xf32>
    %39 = arith.subf %38, %37 : vector<1x256xf32>
    %40 = arith.mulf %39, %39 : vector<1x256xf32>
    %41 = arith.mulf %40, %34 : vector<1x256xf32>
    %cst_18 = arith.constant 0.949999988 : f32
    %42 = vector.broadcast %cst_18 : f32 to vector<1x256xf32>
    %43 = arith.cmpf oge, %8, %42 : vector<1x256xf32>
    %cst_19 = arith.constant 0.000000e+00 : f32
    %44 = vector.broadcast %cst_19 : f32 to vector<1x256xf32>
    %45 = arith.select %11, %41, %44 : vector<1x256xi1>, vector<1x256xf32>
    %46 = arith.extui %11 : vector<1x256xi1> to vector<1x256xi32>
    %47 = arith.sitofp %46 : vector<1x256xi32> to vector<1x256xf32>
    %48 = arith.extui %43 : vector<1x256xi1> to vector<1x256xi32>
    %49 = arith.sitofp %48 : vector<1x256xi32> to vector<1x256xf32>
    %50 = tpu.concatenate %45, %47, %49 in 0 : vector<1x256xf32>, vector<1x256xf32>, vector<1x256xf32> -> vector<3x256xf32>
    %c0_20 = arith.constant 0 : index
    %c0_21 = arith.constant 0 : index
    %c0_22 = arith.constant 0 : index
    %c0_23 = arith.constant 0 : index
    %51 = vector.load %arg7[%c0_20, %c0_21, %c0_22, %c0_23] : memref<1x1x3x256xf32, #tpu.memory_space<vmem>>, vector<1x1x3x256xf32>
    %52 = vector.shape_cast %51 : vector<1x1x3x256xf32> to vector<3x256xf32>
    %53 = arith.addf %52, %50 : vector<3x256xf32>
    %c0_24 = arith.constant 0 : index
    %c0_25 = arith.constant 0 : index
    %c0_26 = arith.constant 0 : index
    %c0_27 = arith.constant 0 : index
    %54 = vector.load %arg7[%c0_24, %c0_25, %c0_26, %c0_27] : memref<1x1x3x256xf32, #tpu.memory_space<vmem>>, vector<1x1x3x256xf32>
    %55 = vector.shape_cast %54 : vector<1x1x3x256xf32> to vector<3x256xf32>
    %56 = vector.shape_cast %53 : vector<3x256xf32> to vector<1x1x3x256xf32>
    tpu.vector_store %arg7[%c0_24, %c0_25, %c0_26, %c0_27], %56 {strides = array<i32>} : memref<1x1x3x256xf32, #tpu.memory_space<vmem>>, vector<1x1x3x256xf32>,
    return
  }
  func.func @transform_0(%arg0: i32, %arg1: i32, %arg2: i32) -> (i32, i32, i32) {
    %c1_i32 = arith.constant 1 : i32
    %0 = arith.muli %arg1, %c1_i32 : i32
    %1 = arith.addi %0, %arg2 : i32
    %c0_i32 = arith.constant 0 : i32
    %c0_i32_0 = arith.constant 0 : i32
    return %arg0, %c0_i32, %1 : i32, i32, i32
  }
  func.func @transform_1(%arg0: i32, %arg1: i32, %arg2: i32) -> (i32, i32, i32) {
    %c1_i32 = arith.constant 1 : i32
    %0 = arith.muli %arg1, %c1_i32 : i32
    %1 = arith.addi %0, %arg2 : i32
    %c0_i32 = arith.constant 0 : i32
    %c0_i32_0 = arith.constant 0 : i32
    return %arg0, %c0_i32, %1 : i32, i32, i32
  }
  func.func @transform_2(%arg0: i32, %arg1: i32, %arg2: i32) -> (i32, i32, i32) {
    %c1_i32 = arith.constant 1 : i32
    %0 = arith.muli %arg1, %c1_i32 : i32
    %1 = arith.addi %0, %arg2 : i32
    %c0_i32 = arith.constant 0 : i32
    %c0_i32_0 = arith.constant 0 : i32
    return %arg0, %c0_i32, %1 : i32, i32, i32
  }
  func.func @transform_3(%arg0: i32, %arg1: i32, %arg2: i32) -> (i32, i32) {
    %c0_i32 = arith.constant 0 : i32
    %c0_i32_0 = arith.constant 0 : i32
    %c0_i32_1 = arith.constant 0 : i32
    return %c0_i32, %c0_i32_0 : i32, i32
  }
  func.func @transform_4(%arg0: i32, %arg1: i32, %arg2: i32) -> (i32, i32, i32, i32) {
    %c0_i32 = arith.constant 0 : i32
    %c0_i32_0 = arith.constant 0 : i32
    %c0_i32_1 = arith.constant 0 : i32
    return %arg0, %arg1, %c0_i32, %c0_i32_0 : i32, i32, i32, i32
  }
}

</mosaic_0001>

<llo_original>
// kernel: tpu_custom_call.1
$region0: #{tpu_custom_call.1}
  #allocation0 [shape = 'u32[]', space=smem, size = 0x4, offset = 0x4, fixed_abs, tag = 'smem constant byte address 0x4 - core index']
  #allocation1 [shape = 'u32[144,128]{1,0:T(1,128)}', space=vmem, size = 0x12000, scoped, tag = 'internal scratch']
  %s0 = inlined_call_operand.vmem [shape: f32[2,37,256], index: 0, kind: input, shape index: {}]
  %s1 = inlined_call_operand.vmem [shape: s32[2,1,256], index: 1, kind: input, shape index: {}]
  %s2 = inlined_call_operand.vmem [shape: f32[2,1,256], index: 2, kind: input, shape index: {}]
  %s3 = inlined_call_operand.vmem [shape: f32[1,37], index: 3, kind: input, shape index: {}]
  %s4 = inlined_call_operand.vmem [shape: f32[2,1,3,256], index: 4, kind: output, shape index: {}]
  %s5 = sld [smem:[#allocation0]]
  $region53: #{tpu_custom_call.1} parent=0
    _
  %s7 = ssub.s32 1, %s5
  %s8 = scalar_select 0, %s7, %s5
  loop: start=0, step=1, limit=4
  $region2: #{tpu_custom_call.1} parent=0 // loop_pre_header
    _
  $region3: #{tpu_custom_call.1} parent=0 // loop_header
    %s10 = sphi 0, %s14
    %p11 = scmp.ge.s32.totalorder %s10, 4
    %s17 = sphi 0, %s36
    %s18 = sphi 0, %s32
    %s19 = sphi 0, %s28
    %s20 = sphi 0, %s17
    %s21 = sphi 0, %s18
    %s22 = sphi 0, %s19
    %s23 = sphi 0, %s20
    %s24 = sphi 0, %s21
    %s25 = sphi 0, %s22
    %s43 = sphi 0, %s45
    %s46 = sphi 0, %s43
    %s47 = sphi 0, %s46
    %s63 = sphi 0, %s47
    %s73 = sphi 0, %s75
    %s76 = sphi 0, %s73
    %s77 = sphi 0, %s76
    %s93 = sphi 0, %s77
    %s103 = sphi 0, %s105
    %s106 = sphi 0, %s103
    %s107 = sphi 0, %s106
    %s123 = sphi 0, %s107
    %s127 = sphi 0, %s127
    %s129 = sphi 0, %s127
    %s130 = sphi 0, %s129
    %s144 = sphi 0, %s130
    %s152 = sphi 0, %s154
    %s155 = sphi 0, %s152
    %s156 = sphi 0, %s155
    %s172 = sphi 0, %s156
  $region4: #{tpu_custom_call.1} parent=0 // loop_header_branch
    %13 = sbr.rel (%p11) target = $region8
  $region5: #{tpu_custom_call.1} parent=0 // loop_body
    %s15 = ssub.s32 %s10, 1
    %s16 = ssub.s32 %s10, 2
    %s26 = sadd.s32 1, %s19
    %p27 = scmp.ge.s32.totalorder %s26, 1
    %s28 = scalar_select %p27, 0, %s26
    %s29 = sadd.s32 1, %s18
    %s30 = scalar_select %p27, %s29, %s18
    %p31 = scmp.ge.s32.totalorder %s30, 1
    %s32 = scalar_select %p31, 0, %s30
    %s33 = sadd.s32 1, %s17
    %s34 = scalar_select %p31, %s33, %s17
    %p35 = scmp.ge.s32.totalorder %s34, 2
    %s36 = scalar_select %p35, 0, %s34
    %s37 = sadd.s32 %s18, %s19
    %s38 = sadd.s32 %s32, %s28
    %s39 = ssub.s32 %s17, %s36
    %s40 = ssub.s32 %s37, %s38
    %s41 = sor.u32 %s39, %s40
    %p42 = scmp.eq.s32.totalorder %s41, 0
    %s44 = sadd.s32 %s43, 1
    %s45 = scalar_select %p42, %s43, %s44
    %p48 = pneg %p42
    %p49 = scmp.eq.s32.totalorder %s10, 1
    %p50 = por %p48, %p49
    %p51 = scmp.ne.s32.totalorder %s43, %s46
    %p52 = scmp.eq.s32.totalorder %s10, 0
    %p53 = por %p51, %p52
    %p54 = scmp.ne.s32.totalorder %s43, %s46
    %p55 = scmp.eq.s32.totalorder %s15, 1
    %p56 = por %p54, %p55
    %p57 = scmp.ne.s32.totalorder %s46, %s47
    %p58 = scmp.eq.s32.totalorder %s15, 0
    %p59 = por %p57, %p58
    %p60 = scmp.ne.s32.totalorder %s46, %s47
    %p61 = scmp.eq.s32.totalorder %s16, 1
    %p62 = por %p60, %p61
    %p64 = scmp.ne.s32.totalorder %s47, %s63
    %p65 = scmp.eq.s32.totalorder %s16, 0
    %p66 = por %p64, %p65
    %s67 = sadd.s32 %s18, %s19
    %s68 = sadd.s32 %s32, %s28
    %s69 = ssub.s32 %s17, %s36
    %s70 = ssub.s32 %s67, %s68
    %s71 = sor.u32 %s69, %s70
    %p72 = scmp.eq.s32.totalorder %s71, 0
    %s74 = sadd.s32 %s73, 1
    %s75 = scalar_select %p72, %s73, %s74
    %p78 = pneg %p72
    %p79 = scmp.eq.s32.totalorder %s10, 1
    %p80 = por %p78, %p79
    %p81 = scmp.ne.s32.totalorder %s73, %s76
    %p82 = scmp.eq.s32.totalorder %s10, 0
    %p83 = por %p81, %p82
    %p84 = scmp.ne.s32.totalorder %s73, %s76
    %p85 = scmp.eq.s32.totalorder %s15, 1
    %p86 = por %p84, %p85
    %p87 = scmp.ne.s32.totalorder %s76, %s77
    %p88 = scmp.eq.s32.totalorder %s15, 0
    %p89 = por %p87, %p88
    %p90 = scmp.ne.s32.totalorder %s76, %s77
    %p91 = scmp.eq.s32.totalorder %s16, 1
    %p92 = por %p90, %p91
    %p94 = scmp.ne.s32.totalorder %s77, %s93
    %p95 = scmp.eq.s32.totalorder %s16, 0
    %p96 = por %p94, %p95
    %s97 = sadd.s32 %s18, %s19
    %s98 = sadd.s32 %s32, %s28
    %s99 = ssub.s32 %s17, %s36
    %s100 = ssub.s32 %s97, %s98
    %s101 = sor.u32 %s99, %s100
    %p102 = scmp.eq.s32.totalorder %s101, 0
    %s104 = sadd.s32 %s103, 1
    %s105 = scalar_select %p102, %s103, %s104
    %p108 = pneg %p102
    %p109 = scmp.eq.s32.totalorder %s10, 1
    %p110 = por %p108, %p109
    %p111 = scmp.ne.s32.totalorder %s103, %s106
    %p112 = scmp.eq.s32.totalorder %s10, 0
    %p113 = por %p111, %p112
    %p114 = scmp.ne.s32.totalorder %s103, %s106
    %p115 = scmp.eq.s32.totalorder %s15, 1
    %p116 = por %p114, %p115
    %p117 = scmp.ne.s32.totalorder %s106, %s107
    %p118 = scmp.eq.s32.totalorder %s15, 0
    %p119 = por %p117, %p118
    %p120 = scmp.ne.s32.totalorder %s106, %s107
    %p121 = scmp.eq.s32.totalorder %s16, 1
    %p122 = por %p120, %p121
    %p124 = scmp.ne.s32.totalorder %s107, %s123
    %p125 = scmp.eq.s32.totalorder %s16, 0
    %p126 = por %p124, %p125
    %s128 = sadd.s32 %s127, 1
    %p131 = scmp.eq.s32.totalorder %s10, 1
    %p132 = scmp.ne.s32.totalorder %s127, %s129
    %p133 = scmp.eq.s32.totalorder %s10, 0
    %p134 = por %p132, %p133
    %p135 = scmp.ne.s32.totalorder %s127, %s129
    %p136 = scmp.eq.s32.totalorder %s15, 1
    %p137 = por %p135, %p136
    %p138 = scmp.ne.s32.totalorder %s129, %s130
    %p139 = scmp.eq.s32.totalorder %s15, 0
    %p140 = por %p138, %p139
    %p141 = scmp.ne.s32.totalorder %s129, %s130
    %p142 = scmp.eq.s32.totalorder %s16, 1
    %p143 = por %p141, %p142
    %p145 = scmp.ne.s32.totalorder %s130, %s144
    %p146 = scmp.eq.s32.totalorder %s16, 0
    %p147 = por %p145, %p146
    %s148 = ssub.s32 %s17, %s36
    %s149 = ssub.s32 %s18, %s32
    %s150 = sor.u32 %s148, %s149
    %p151 = scmp.eq.s32.totalorder %s150, 0
    %s153 = sadd.s32 %s152, 1
    %s154 = scalar_select %p151, %s152, %s153
    %p157 = pneg %p151
    %p158 = scmp.eq.s32.totalorder %s10, 1
    %p159 = por %p157, %p158
    %p160 = scmp.ne.s32.totalorder %s152, %s155
    %p161 = scmp.eq.s32.totalorder %s10, 0
    %p162 = por %p160, %p161
    %p163 = scmp.ne.s32.totalorder %s152, %s155
    %p164 = scmp.eq.s32.totalorder %s15, 1
    %p165 = por %p163, %p164
    %p166 = scmp.ne.s32.totalorder %s155, %s156
    %p167 = scmp.eq.s32.totalorder %s15, 0
    %p168 = por %p166, %p167
    %p169 = scmp.ne.s32.totalorder %s155, %s156
    %p170 = scmp.eq.s32.totalorder %s16, 1
    %p171 = por %p169, %p170
    %p173 = scmp.ne.s32.totalorder %s156, %s172
    %p174 = scmp.eq.s32.totalorder %s16, 0
    %p175 = por %p173, %p174
    %p176 = scmp.le.s32.totalorder 1, %s10
    %p177 = scmp.lt.s32.totalorder %s10, 3
    %p178 = pnand %p176, %p177
    %p179 = pneg %p178
    // Predicated region
    $region9: #{tpu_custom_call.1} parent=5 // pred_check
      _
    $region10: #{tpu_custom_call.1} parent=5 // pred_check_branch
      %181 = sbr.rel (%p178) target = $region12
    $region11: #{tpu_custom_call.1} parent=5 // pred_region
      %s182 = ssub.s32 %s10, 1
      // Predicated region
      $region13: #{tpu_custom_call.1} parent=11 // pred_check
        %p183 = pneg %p140
      $region14: #{tpu_custom_call.1} parent=11 // pred_check_branch
        %185 = sbr.rel (%p183) target = $region16
      $region15: #{tpu_custom_call.1} parent=11 // pred_region
        _
      $region16: #{tpu_custom_call.1} parent=11 // pred_fallthru
        _
    $region12: #{tpu_custom_call.1} parent=5 // pred_fallthru
      _
    %p186 = scmp.lt.s32.totalorder %s10, 2
    // Predicated region
    $region17: #{tpu_custom_call.1} parent=5 // pred_check
      %p187 = pneg %p186
    $region18: #{tpu_custom_call.1} parent=5 // pred_check_branch
      %189 = sbr.rel (%p187) target = $region20
    $region19: #{tpu_custom_call.1} parent=5 // pred_region
      // Predicated region
      $region21: #{tpu_custom_call.1} parent=19 // pred_check
        %p190 = pneg %p53
      $region22: #{tpu_custom_call.1} parent=19 // pred_check_branch
        %192 = sbr.rel (%p190) target = $region24
      $region23: #{tpu_custom_call.1} parent=19 // pred_region
        %s193 = sadd.s32 %s18, %s19
        %s194 = smul.u32 2, %s193
        %p195 = scmp.lt.s32.totalorder %s17, 1
        %s196 = scalar_select %p195, %s17, 1
        %p197 = scmp.lt.s32.totalorder %s194, 1
        %s198 = scalar_select %p197, %s194, 1
        %s199 = smul.addr %s196, 10
        %s200 = sadd.s32 %s198, %s199
        %s201 = smul.addr %s200, 8
        %s202 = scalar_lea.vmem %s0, %s201
        %s203 = sadd.s32 %s18, %s19
        %s204 = smul.u32 2, %s203
      $region24: #{tpu_custom_call.1} parent=19 // pred_fallthru
        _
      // Predicated region
      $region25: #{tpu_custom_call.1} parent=19 // pred_check
        %p205 = pneg %p83
      $region26: #{tpu_custom_call.1} parent=19 // pred_check_branch
        %207 = sbr.rel (%p205) target = $region28
      $region27: #{tpu_custom_call.1} parent=19 // pred_region
        %s208 = sadd.s32 %s18, %s19
        %s209 = smul.u32 2, %s208
        %p210 = scmp.lt.s32.totalorder %s17, 1
        %s211 = scalar_select %p210, %s17, 1
        %p212 = scmp.lt.s32.totalorder %s209, 1
        %s213 = scalar_select %p212, %s209, 1
        %s214 = smul.addr %s211, 2
        %s215 = sadd.s32 %s213, %s214
        %s216 = scalar_lea.vmem %s1, %s215
        %s217 = sadd.s32 %s18, %s19
        %s218 = smul.u32 2, %s217
      $region28: #{tpu_custom_call.1} parent=19 // pred_fallthru
        _
      // Predicated region
      $region29: #{tpu_custom_call.1} parent=19 // pred_check
        %p219 = pneg %p113
      $region30: #{tpu_custom_call.1} parent=19 // pred_check_branch
        %221 = sbr.rel (%p219) target = $region32
      $region31: #{tpu_custom_call.1} parent=19 // pred_region
        %s222 = sadd.s32 %s18, %s19
        %s223 = smul.u32 2, %s222
        %p224 = scmp.lt.s32.totalorder %s17, 1
        %s225 = scalar_select %p224, %s17, 1
        %p226 = scmp.lt.s32.totalorder %s223, 1
        %s227 = scalar_select %p226, %s223, 1
        %s228 = smul.addr %s225, 2
        %s229 = sadd.s32 %s227, %s228
        %s230 = scalar_lea.vmem %s2, %s229
        %s231 = sadd.s32 %s18, %s19
        %s232 = smul.u32 2, %s231
      $region32: #{tpu_custom_call.1} parent=19 // pred_fallthru
        _
    $region20: #{tpu_custom_call.1} parent=5 // pred_fallthru
      _
    %p233 = scmp.le.s32.totalorder 1, %s10
    %p234 = scmp.lt.s32.totalorder %s10, 3
    %p235 = pnand %p233, %p234
    %p236 = pneg %p235
    // Predicated region
    $region33: #{tpu_custom_call.1} parent=5 // pred_check
      _
    $region34: #{tpu_custom_call.1} parent=5 // pred_check_branch
      %238 = sbr.rel (%p235) target = $region36
    $region35: #{tpu_custom_call.1} parent=5 // pred_region
      %s239 = ssub.s32 %s10, 1
      %s240 = sadd.s32 %s21, %s22
      %s241 = smul.u32 2, %s240
      %p242 = scmp.lt.s32.totalorder %s20, 1
      %s243 = scalar_select %p242, %s20, 1
      %p244 = scmp.lt.s32.totalorder %s241, 1
      %s245 = scalar_select %p244, %s241, 1
      %s246 = smul.addr %s243, 10
      %s247 = sadd.s32 %s245, %s246
      %s248 = smul.addr %s247, 8
      %s249 = scalar_lea.vmem %s0, %s248
      %p250 = pneg %p59
      %p251 = pneg %p56
      %s252 = sadd.s32 %s21, %s22
      %s253 = smul.u32 2, %s252
      %p254 = scmp.lt.s32.totalorder %s20, 1
      %s255 = scalar_select %p254, %s20, 1
      %p256 = scmp.lt.s32.totalorder %s253, 1
      %s257 = scalar_select %p256, %s253, 1
      %s258 = smul.addr %s255, 2
      %s259 = sadd.s32 %s257, %s258
      %s260 = scalar_lea.vmem %s1, %s259
      %p261 = pneg %p89
      %p262 = pneg %p86
      %s263 = sadd.s32 %s21, %s22
      %s264 = smul.u32 2, %s263
      %p265 = scmp.lt.s32.totalorder %s20, 1
      %s266 = scalar_select %p265, %s20, 1
      %p267 = scmp.lt.s32.totalorder %s264, 1
      %s268 = scalar_select %p267, %s264, 1
      %s269 = smul.addr %s266, 2
      %s270 = sadd.s32 %s268, %s269
      %s271 = scalar_lea.vmem %s2, %s270
      %p272 = pneg %p119
      %p273 = pneg %p116
      %p274 = pneg %p140
      %p275 = pneg %p137
      %p276 = pneg %p168
      %p277 = pneg %p165
      %p278 = scmp.lt.s32.totalorder %s20, 1
      %s279 = scalar_select %p278, %s20, 1
      %p280 = scmp.lt.s32.totalorder %s21, 0
      %s281 = scalar_select %p280, %s21, 0
      %s282 = smul.addr %s281, 2
      %s283 = smul.addr %s279, 2
      %s284 = sadd.s32 %s282, %s283
      %s285 = smul.addr %s284, 4
      %s286 = scalar_lea.vmem %s4, %s285
      %s287 = sadd.s32 %s21, %s22
      %s288 = smul.u32 2, %s287
      %p289 = scmp.lt.s32.totalorder %s20, 1
      %s290 = scalar_select %p289, %s20, 1
      %p291 = scmp.lt.s32.totalorder %s288, 1
      %s292 = scalar_select %p291, %s288, 1
      %s293 = smul.addr %s290, 10
      %s294 = sadd.s32 %s292, %s293
      %s295 = smul.addr %s294, 8
      %s296 = scalar_lea.vmem %s0, %s295
      %s297 = sadd.s32 %s21, %s22
      %s298 = smul.u32 2, %s297
      %s299 = sadd.s32 %s21, %s22
      %s300 = smul.u32 2, %s299
      %p301 = scmp.lt.s32.totalorder %s20, 1
      %s302 = scalar_select %p301, %s20, 1
      %p303 = scmp.lt.s32.totalorder %s300, 1
      %s304 = scalar_select %p303, %s300, 1
      %s305 = smul.addr %s302, 2
      %s306 = sadd.s32 %s304, %s305
      %s307 = scalar_lea.vmem %s1, %s306
      %s308 = sadd.s32 %s21, %s22
      %s309 = smul.u32 2, %s308
      %s310 = sadd.s32 %s21, %s22
      %s311 = smul.u32 2, %s310
      %p312 = scmp.lt.s32.totalorder %s20, 1
      %s313 = scalar_select %p312, %s20, 1
      %p314 = scmp.lt.s32.totalorder %s311, 1
      %s315 = scalar_select %p314, %s311, 1
      %s316 = smul.addr %s313, 2
      %s317 = sadd.s32 %s315, %s316
      %s318 = scalar_lea.vmem %s2, %s317
      %s319 = sadd.s32 %s21, %s22
      %s320 = smul.u32 2, %s319
      %p321 = scmp.lt.s32.totalorder %s20, 1
      %s322 = scalar_select %p321, %s20, 1
      %p323 = scmp.lt.s32.totalorder %s21, 0
      %s324 = scalar_select %p323, %s21, 0
      %s325 = smul.addr %s324, 2
      %s326 = smul.addr %s322, 2
      %s327 = sadd.s32 %s325, %s326
      %s328 = smul.addr %s327, 4
      %s329 = scalar_lea.vmem %s4, %s328
      %p330 = scmp.eq.s32.totalorder %s22, 0
      // Predicated region
      $region37: #{tpu_custom_call.1} parent=35 // pred_check
        %p331 = pneg %p330
      $region38: #{tpu_custom_call.1} parent=35 // pred_check_branch
        %333 = sbr.rel (%p331) target = $region40
      $region39: #{tpu_custom_call.1} parent=35 // pred_region
        %334 = vst [vmem:[%s329] sm:$0x77] 0.0
      $region40: #{tpu_custom_call.1} parent=35 // pred_fallthru
        _
      %v335 = vld [vmem:[%s296] sm:$0xff]
      %v336 = vld [vmem:[%s296 + $0x8] sm:$0xff]
      %v337 = vld [vmem:[%s296 + $0x10] sm:$0xff]
      %v338 = vld [vmem:[%s296 + $0x18] sm:$0xff]
      %v339 = vld [vmem:[%s296 + $0x20] sm:$0xff]
      %v340 = vld [vmem:[%s296 + $0x28] sm:$0xff]
      %v341 = vld [vmem:[%s296 + $0x30] sm:$0xff]
      %v342 = vld [vmem:[%s296 + $0x38] sm:$0xff]
      %v343 = vld [vmem:[%s296 + $0x40] sm:$0x1f]
      %v344 = vld [vmem:[%s296 + $0x48] sm:$0x1f]
      %v345 = vld [vmem:[%s307] sm:$0x3]
      %v346 = vld [vmem:[%s318] sm:$0x3]
      %v347 = vld [vmem:[%s3] sm:$0x1]
      %vm348 = vcmp.gt.s32.totalorder %v345, 0
      %v349 = vsel %vm348, 1, 0
      %v350 = vsub.s32 %v345, %v349
      %v351 = vlaneseq
      %v352 = vshrl.u32 %v351, 7
      %v353 = vadd.s32 %v352, 8
      %v354 = vadd.s32 %v352, 16
      %v355 = vadd.s32 %v352, 24
      %v356 = vadd.s32 %v352, 32
      %v357 = vlaneseq
      %v358 = vshrl.u32 %v357, 7
      %v359 = vsub.s32 0, %v358
      %v360 = vrot.slane %v350, %v359
      %v361 = vlaneseq
      %v362 = vshrl.u32 %v361, 7
      %v363 = vsub.s32 1, %v362
      %v364 = vrot.slane %v350, %v363
      %vm365 = vcmp.eq.s32.totalorder %v352, %v360
      %vm366 = vcmp.eq.s32.totalorder %v352, %v364
      %vm367 = vcmp.eq.s32.totalorder %v353, %v360
      %vm368 = vcmp.eq.s32.totalorder %v353, %v364
      %vm369 = vcmp.eq.s32.totalorder %v354, %v360
      %vm370 = vcmp.eq.s32.totalorder %v354, %v364
      %vm371 = vcmp.eq.s32.totalorder %v355, %v360
      %vm372 = vcmp.eq.s32.totalorder %v355, %v364
      %vm373 = vcmp.eq.s32.totalorder %v356, %v360
      %vm374 = vcmp.eq.s32.totalorder %v356, %v364
      %v375 = vmax.f32 %v335, %v339
      %v376 = vmax.f32 %v337, %v341
      %vm377 = vcmask 1044480
      %v378 = vsel %vm377, %v343, -inf
      %v379 = vmax.f32 %v375, %v378
      %v380 = vmax.f32 %v379, %v376
      %v381 = vrot.slane %v380, 4
      %v382 = vmax.f32 %v380, %v381
      %v383 = vrot.slane %v382, 2
      %v384 = vmax.f32 %v382, %v383
      %v385 = vrot.slane %v384, 1
      %v386 = vmax.f32 %v384, %v385
      %v387 = vmax.f32 %v336, %v340
      %v388 = vmax.f32 %v338, %v342
      %v389 = vsel %vm377, %v344, -inf
      %v390 = vmax.f32 %v387, %v389
      %v391 = vmax.f32 %v390, %v388
      %v392 = vrot.slane %v391, 4
      %v393 = vmax.f32 %v391, %v392
      %v394 = vrot.slane %v393, 2
      %v395 = vmax.f32 %v393, %v394
      %v396 = vrot.slane %v395, 1
      %v397 = vmax.f32 %v395, %v396
      %v398 = vsub.f32 %v335, %v386
      %v399 = vsub.f32 %v336, %v397
      %v400 = vsub.f32 %v337, %v386
      %v401 = vsub.f32 %v338, %v397
      %v402 = vsub.f32 %v339, %v386
      %v403 = vsub.f32 %v340, %v397
      %v404 = vsub.f32 %v341, %v386
      %v405 = vsub.f32 %v342, %v397
      %v406 = vsub.f32 %v343, %v386
      %v407 = vsub.f32 %v344, %v397
      %v408 = vmul.f32 %v398, 1.442695
      %v409 = vpow.pop %v408
      %v410 = vmul.f32 %v399, 1.442695
      %v411 = vpow.pop %v410
      %v412 = vmul.f32 %v400, 1.442695
      %v413 = vpow.pop %v412
      %v414 = vmul.f32 %v401, 1.442695
      %v415 = vpow.pop %v414
      %v416 = vmul.f32 %v402, 1.442695
      %v417 = vpow.pop %v416
      %v418 = vmul.f32 %v403, 1.442695
      %v419 = vpow.pop %v418
      %v420 = vmul.f32 %v404, 1.442695
      %v421 = vpow.pop %v420
      %v422 = vmul.f32 %v405, 1.442695
      %v423 = vpow.pop %v422
      %v424 = vmul.f32 %v406, 1.442695
      %v425 = vpow.pop %v424
      %v426 = vmul.f32 %v407, 1.442695
      %v427 = vpow.pop %v426
      %v428 = vadd.f32 %v409, %v413
      %v429 = vadd.f32 %v428, %v417
      %v430 = vadd.f32 %v429, %v421
      %v431 = vsel %vm377, %v425, 0.0
      %v432 = vadd.f32 %v430, %v431
      %v433 = vrot.slane %v432, 4
      %v434 = vadd.f32 %v432, %v433
      %v435 = vrot.slane %v434, 2
      %v436 = vadd.f32 %v434, %v435
      %v437 = vrot.slane %v436, 1
      %v438 = vadd.f32 %v436, %v437
      %v439 = vadd.f32 %v411, %v415
      %v440 = vadd.f32 %v439, %v419
      %v441 = vadd.f32 %v440, %v423
      %v442 = vsel %vm377, %v427, 0.0
      %v443 = vadd.f32 %v441, %v442
      %v444 = vrot.slane %v443, 4
      %v445 = vadd.f32 %v443, %v444
      %v446 = vrot.slane %v445, 2
      %v447 = vadd.f32 %v445, %v446
      %v448 = vrot.slane %v447, 1
      %v449 = vadd.f32 %v447, %v448
      %v450 = vlog2.pop %v438
      %v451 = vmul.f32 %v450, 0.6931472
      %v452 = vlog2.pop %v449
      %v453 = vmul.f32 %v452, 0.6931472
      %v454 = vadd.f32 %v451, %v386
      %v455 = vadd.f32 %v453, %v397
      %v456 = vsel %vm365, %v335, 0.0
      %v457 = vsel %vm366, %v336, 0.0
      %v458 = vsel %vm367, %v337, 0.0
      %v459 = vsel %vm368, %v338, 0.0
      %v460 = vsel %vm369, %v339, 0.0
      %v461 = vsel %vm370, %v340, 0.0
      %v462 = vsel %vm371, %v341, 0.0
      %v463 = vsel %vm372, %v342, 0.0
      %v464 = vsel %vm373, %v343, 0.0
      %v465 = vsel %vm374, %v344, 0.0
      %v466 = vadd.f32 %v456, %v458
      %v467 = vadd.f32 %v466, %v460
      %v468 = vadd.f32 %v467, %v462
      %v469 = vsel %vm377, %v464, 0.0
      %v470 = vadd.f32 %v468, %v469
      %v471 = vrot.slane %v470, 4
      %v472 = vadd.f32 %v470, %v471
      %v473 = vrot.slane %v472, 2
      %v474 = vadd.f32 %v472, %v473
      %v475 = vrot.slane %v474, 1
      %v476 = vadd.f32 %v474, %v475
      %v477 = vadd.f32 %v457, %v459
      %v478 = vadd.f32 %v477, %v461
      %v479 = vadd.f32 %v478, %v463
      %v480 = vsel %vm377, %v465, 0.0
      %v481 = vadd.f32 %v479, %v480
      %v482 = vrot.slane %v481, 4
      %v483 = vadd.f32 %v481, %v482
      %v484 = vrot.slane %v483, 2
      %v485 = vadd.f32 %v483, %v484
      %v486 = vrot.slane %v485, 1
      %v487 = vadd.f32 %v485, %v486
      %v488 = vsel %vm365, 1, 0
      %v489 = vsel %vm366, 1, 0
      %v490 = vsel %vm367, 1, 0
      %v491 = vsel %vm368, 1, 0
      %v492 = vsel %vm369, 1, 0
      %v493 = vsel %vm370, 1, 0
      %v494 = vsel %vm371, 1, 0
      %v495 = vsel %vm372, 1, 0
      %v496 = vsel %vm373, 1, 0
      %v497 = vsel %vm374, 1, 0
      %v498 = vcvt.s32.f32 %v488
      %v499 = vcvt.s32.f32 %v489
      %v500 = vcvt.s32.f32 %v490
      %v501 = vcvt.s32.f32 %v491
      %v502 = vcvt.s32.f32 %v492
      %v503 = vcvt.s32.f32 %v493
      %v504 = vcvt.s32.f32 %v494
      %v505 = vcvt.s32.f32 %v495
      %v506 = vcvt.s32.f32 %v496
      %v507 = vcvt.s32.f32 %v497
      %vm508 = vcmask 302080
      %v510 = vsel %vm508, %v347, 0
      %v513 = vsel %vm377, %v506, 0
      %v516 = vsel %vm377, %v507, 0
      %518 = vmatprep.subr.mxu0 %v499
      %519 = vmatpush1.msra.mxu0 %v498
      %520 = vmatprep.subr.mxu0 %v501
      %521 = vmatpush1.msra.mxu0 %v500
      %522 = vmatprep.subr.mxu0 %v503
      %523 = vmatpush1.msra.mxu0 %v502
      %524 = vmatprep.subr.mxu0 %v505
      %525 = vmatpush1.msra.mxu0 %v504
      %526 = vmatprep.subr.mxu0 %v516
      %527 = vmatpush1.msra.mxu0 %v513
      %528 = vmatprep.subr.mxu0 0.0
      %529 = vmatpush1.msra.mxu0 0.0
      %530 = vmatprep.subr.mxu0 0.0
      %531 = vmatpush1.msra.mxu0 0.0
      %532 = vmatprep.subr.mxu0 0.0
      %533 = vmatpush1.msra.mxu0 0.0
      %534 = vmatprep.subr.mxu0 0.0
      %535 = vmatpush1.msra.mxu0 0.0
      %536 = vmatprep.subr.mxu0 0.0
      %537 = vmatpush1.msra.mxu0 0.0
      %538 = vmatprep.subr.mxu0 0.0
      %539 = vmatpush1.msra.mxu0 0.0
      %540 = vmatprep.subr.mxu0 0.0
      %541 = vmatpush1.msra.mxu0 0.0
      %542 = vmatprep.subr.mxu0 0.0
      %543 = vmatpush1.msra.mxu0 0.0
      %544 = vmatprep.subr.mxu0 0.0
      %545 = vmatpush1.msra.mxu0 0.0
      %546 = vmatprep.subr.mxu0 0.0
      %547 = vmatpush1.msra.mxu0 0.0
      %548 = vmatprep.subr.mxu0 0.0
      %549 = vmatpush1.msra.mxu0 0.0
      %550 = vmatprep.subr.mxu0 0.0
      %551 = vmatpush1.msra.mxu0 0.0
      %552 = vmatprep.subr.mxu0 0.0
      %553 = vmatpush1.msra.mxu0 0.0
      %554 = vmatprep.subr.mxu0 0.0
      %555 = vmatpush1.msra.mxu0 0.0
      %556 = vmatprep.subr.mxu0 0.0
      %557 = vmatpush1.msra.mxu0 0.0
      %558 = vmatprep.subr.mxu0 0.0
      %559 = vmatpush1.msra.mxu0 0.0
      %560 = vmatprep.subr.mxu0 0.0
      %561 = vmatpush1.msra.mxu0 0.0
      %562 = vmatprep.subr.mxu0 0.0
      %563 = vmatpush1.msra.mxu0 0.0
      %564 = vmatprep.subr.mxu0 0.0
      %565 = vmatpush1.msra.mxu0 0.0
      %566 = vmatprep.subr.mxu0 0.0
      %567 = vmatpush1.msra.mxu0 0.0
      %568 = vmatprep.subr.mxu0 0.0
      %569 = vmatpush1.msra.mxu0 0.0
      %570 = vmatprep.subr.mxu0 0.0
      %571 = vmatpush1.msra.mxu0 0.0
      %572 = vmatprep.subr.mxu0 0.0
      %573 = vmatpush1.msra.mxu0 0.0
      %574 = vmatprep.subr.mxu0 0.0
      %575 = vmatpush1.msra.mxu0 0.0
      %576 = vmatprep.subr.mxu0 0.0
      %577 = vmatpush1.msra.mxu0 0.0
      %578 = vmatprep.subr.mxu0 0.0
      %579 = vmatpush1.msra.mxu0 0.0
      %580 = vmatprep.subr.mxu0 0.0
      %581 = vmatpush1.msra.mxu0 0.0
      %582 = vmatprep.mubr.f32.mxu0 0.0
      %583 = vmatmul.mubr.f32.gmra.mrb[0].mxu0 %v510
      %v584 = vpop.f32.mrb[0].mxu0
      %v585 = vadd.f32 0.0, %v584
      %v586 = vpop.f32.mrb[0].mxu0
      %v587 = vadd.f32 0.0, %v586
      %588 = vdwg.mxu0
      %v589 = vsub.f32 %v454, %v476
      %v590 = vsub.f32 %v455, %v487
      %v591 = vmul.f32 %v585, %v589
      %v592 = vmul.f32 %v587, %v590
      %v593 = vsub.f32 0.0, %v591
      %v594 = vsub.f32 0.0, %v592
      %v595 = vmul.f32 %v593, 1.442695
      %v596 = vpow.pop %v595
      %v597 = vmul.f32 %v594, 1.442695
      %v598 = vpow.pop %v597
      %v599 = vsub.f32 1.0, %v596
      %v600 = vsub.f32 1.0, %v598
      %v601 = vmul.f32 %v599, %v599
      %v602 = vmul.f32 %v600, %v600
      %v603 = vmul.f32 %v601, %v591
      %v604 = vmul.f32 %v602, %v592
      %vm605 = vcmp.ge.f32.partialorder %v346, 0.95
      %v608 = vcombine.low %v603, %v604
      %v610 = vunpack.c.l.s4 1966171168
      %v611 = vunpack.c.0.s8 %v610
      %v612 = vlaneseq
      %v613 = vshrl.u32 %v612, 7
      %v614 = vsub.s32 %v611, %v613
      %v615 = vrot.slane %v608, %v614
      %v617 = vunpack.c.l.s4 1966171168
      %v618 = vunpack.c.0.s8 %v617
      %v619 = vlaneseq
      %v620 = vshrl.u32 %v619, 7
      %v621 = vsub.s32 %v618, %v620
      %v622 = vrot.slane %v615, %v621
      %v624 = vsel %vm348, %v622, 0.0
      %v625 = vcvt.s32.f32 %v349
      %v626 = vsel %vm605, 1, 0
      %v627 = vcvt.s32.f32 %v626
      %v629 = vlaneseq
      %v630 = vshrl.u32 %v629, 7
      %v631 = vsub.s32 0, %v630
      %v632 = vrot.slane %v624, %v631
      %v633 = vlaneseq
      %v634 = vshrl.u32 %v633, 7
      %v635 = vsub.s32 1, %v634
      %v636 = vrot.slane %v624, %v635
      %v640 = vlaneseq
      %v641 = vshrl.u32 %v640, 7
      %v642 = vsub.s32 0, %v641
      %v643 = vrot.slane %v625, %v642
      %v644 = vlaneseq
      %v645 = vshrl.u32 %v644, 7
      %v646 = vsub.s32 1, %v645
      %v647 = vrot.slane %v625, %v646
      %v651 = vlaneseq
      %v652 = vshrl.u32 %v651, 7
      %v653 = vsub.s32 0, %v652
      %v654 = vrot.slane %v627, %v653
      %v655 = vlaneseq
      %v656 = vshrl.u32 %v655, 7
      %v657 = vsub.s32 1, %v656
      %v658 = vrot.slane %v627, %v657
      %vm661 = vcmask 1040384
      %v662 = vsel %vm661, %v632, %v643
      %v663 = vsel %vm661, %v636, %v647
      %vm664 = vcmask 1041408
      %v665 = vsel %vm664, %v662, %v654
      %v666 = vsel %vm664, %v663, %v658
      %v667 = vld [vmem:[%s329] sm:$0x77]
      %v670 = vcombine.low %v665, %v666
      %v672 = vadd.f32 %v667, %v670
      %673 = vst [vmem:[%s329] sm:$0x77] %v672
      %p674 = scmp.lt.s32.totalorder %s20, 1
      %s675 = scalar_select %p674, %s20, 1
      %p676 = scmp.lt.s32.totalorder %s21, 0
      %s677 = scalar_select %p676, %s21, 0
      %s678 = smul.addr %s677, 2
      %s679 = smul.addr %s675, 2
      %s680 = sadd.s32 %s678, %s679
      %s681 = smul.addr %s680, 4
      %s682 = scalar_lea.vmem %s4, %s681
      // Predicated region
      $region41: #{tpu_custom_call.1} parent=35 // pred_check
        %p683 = pneg %p165
      $region42: #{tpu_custom_call.1} parent=35 // pred_check_branch
        %685 = sbr.rel (%p683) target = $region44
      $region43: #{tpu_custom_call.1} parent=35 // pred_region
        _
      $region44: #{tpu_custom_call.1} parent=35 // pred_fallthru
        _
    $region36: #{tpu_custom_call.1} parent=5 // pred_fallthru
      _
    %p686 = scmp.le.s32.totalorder 2, %s10
    // Predicated region
    $region45: #{tpu_custom_call.1} parent=5 // pred_check
      %p687 = pneg %p686
    $region46: #{tpu_custom_call.1} parent=5 // pred_check_branch
      %689 = sbr.rel (%p687) target = $region48
    $region47: #{tpu_custom_call.1} parent=5 // pred_region
      %s690 = ssub.s32 %s10, 2
      // Predicated region
      $region49: #{tpu_custom_call.1} parent=47 // pred_check
        %p691 = pneg %p171
      $region50: #{tpu_custom_call.1} parent=47 // pred_check_branch
        %693 = sbr.rel (%p691) target = $region52
      $region51: #{tpu_custom_call.1} parent=47 // pred_region
        %p694 = scmp.lt.s32.totalorder %s23, 1
        %s695 = scalar_select %p694, %s23, 1
        %p696 = scmp.lt.s32.totalorder %s24, 0
        %s697 = scalar_select %p696, %s24, 0
        %s698 = smul.addr %s697, 2
        %s699 = smul.addr %s695, 2
        %s700 = sadd.s32 %s698, %s699
        %s701 = smul.addr %s700, 4
        %s702 = scalar_lea.vmem %s4, %s701
      $region52: #{tpu_custom_call.1} parent=47 // pred_fallthru
        _
    $region48: #{tpu_custom_call.1} parent=5 // pred_fallthru
      _
  $region6: #{tpu_custom_call.1} parent=0 // loop_footer
    %s14 = sadd.s32 1, %s10
  $region7: #{tpu_custom_call.1} parent=0 // loop_footer_branch
    %9 = sbr.rel target = $region3
  $region8: #{tpu_custom_call.1} parent=0 // loop_exit
    _

</llo_original>
